<compile_context>
chip_gen: v7x
topology: tpu7x:2x2x1
jax: 0.10.0
libtpu: 0.0.40
codegen_flags: <defaults>
</compile_context>

<pallas_src>
import jax
import jax.numpy as jnp
from jax import lax
from jax.experimental import pallas as pl
from jax.experimental.pallas import tpu as pltpu

LANE = 128


def _pack_weights(params, H, C, mxu_dtype):
    """Fold the three convs (and all biases) into three dense matmul operands.

    Runs once at setup time (hoisted out of the per-call path).
    """
    w1, b1, w2, b2, w3, b3 = [jnp.asarray(p, jnp.float32) for p in params]
    h1, Cin, KH, _ = w1.shape
    h2 = w2.shape[0]
    H1 = H - KH + 1
    HC = H * C
    assert Cin == C - 1 and w2.shape[2] == H1 and w3.shape[1] == h2 + 1
    R1 = h1 * H1

    # conv1 as a Toeplitz matrix over the augmented input (ones row at HC):
    #   W1[o*H1+t, (t+k)*C + c] = w1[o, c, k]
    #   W1[:R1, HC]             = repeat(b1, H1)   (bias column, hits the 1-row)
    #   W1[R1, HC]              = 1                (y1 row R1 is a constant 1)
    o_i = jnp.arange(h1)[:, None, None, None]
    t_i = jnp.arange(H1)[None, :, None, None]
    c_i = jnp.arange(Cin)[None, None, :, None]
    k_i = jnp.arange(KH)[None, None, None, :]
    rows = jnp.broadcast_to(o_i * H1 + t_i, (h1, H1, Cin, KH)).reshape(-1)
    cols = jnp.broadcast_to((t_i + k_i) * C + c_i, (h1, H1, Cin, KH)).reshape(-1)
    vals = jnp.broadcast_to(w1[..., 0][:, None, :, :], (h1, H1, Cin, KH)).reshape(-1)
    w1big = jnp.zeros((R1 + 1, HC + 1), jnp.float32)
    w1big = w1big.at[rows, cols].set(vals)
    w1big = w1big.at[:R1, HC].set(jnp.repeat(b1, H1))
    w1big = w1big.at[R1, HC].set(1.0)

    # conv2 flattened; b2 folded via y1's constant row; one extra constant
    # output row so b3 can be folded into the conv3 matmul as well.
    w2big = jnp.zeros((h2 + 1, R1 + 1), jnp.float32)
    w2big = w2big.at[:h2, :R1].set(w2[..., 0].reshape(h2, R1))
    w2big = w2big.at[:h2, R1].set(b2)
    w2big = w2big.at[h2, R1].set(1.0)

    # conv3 (1x1): taps 0..h2-1 act on y2, tap h2 acts on last_weights (kept as
    # a compile-time scalar FMA in the kernel), b3 rides on y2's constant row.
    w3flat = w3[:, :, 0, 0]                                   # (1, h2+1)
    w3big = jnp.zeros((1, h2 + 1), jnp.float32)
    w3big = w3big.at[0, :h2].set(w3flat[0, :h2])
    w3big = w3big.at[0, h2].set(b3[0])
    last_w = float(w3flat[0, h2])                             # immediate constant

    return (w1big.astype(mxu_dtype), w2big.astype(mxu_dtype),
            w3big.astype(mxu_dtype), last_w, h1, h2, H1)


def make_cnn_feature_extractor(params, states_dim, *, mxu_dtype=jnp.float32,
                               nb_max=1024):
    """Returns a jitted `apply(state) -> (B, W)` closure with packed weights."""
    H, W, C = states_dim
    HC = H * C
    HCa = HC + 1                                   # + constant-1 row
    w1big, w2big, w3big, last_w, h1, h2, H1 = _pack_weights(params, H, C, mxu_dtype)
    R1a = h1 * H1 + 1                              # conv1 rows + constant row
    R2a = h2 + 1                                   # conv2 rows + constant row

    def kernel(x_ref, w1_ref, w2_ref, w3_ref, out_ref):
        x_blk = x_ref[...]                                             # (HCa, Nb)
        y1 = jnp.maximum(
            jnp.dot(w1_ref[...], x_blk,
                    preferred_element_type=jnp.float32), 0.0)          # (R1a, Nb)
        y2 = jnp.maximum(
            jnp.dot(w2_ref[...], y1.astype(x_blk.dtype),
                    preferred_element_type=jnp.float32), 0.0)          # (R2a, Nb)
        z = jnp.dot(w3_ref[...], y2.astype(x_blk.dtype),
                    preferred_element_type=jnp.float32)                # (1, Nb)
        # last-weights channel == row HC-1 of the already-loaded block.
        z = z + last_w * x_blk[HC - 1:HC, :].astype(jnp.float32)
        out_ref[...] = jnp.maximum(z, 0.0)

    @jax.jit
    def apply(state):
        B, Hs, Ws, Cs = state.shape
        assert (Hs, Ws, Cs) == (H, W, C), (state.shape, states_dim)
        N = B * W
        if N <= LANE:
            Nb = LANE
        else:
            # Widen Nb up to nb_max, but keep >= 2 blocks so v7x's two
            # TensorCores both get work (harmless on single-TC v5e/v6e).
            Nb = min(nb_max, pl.cdiv(pl.cdiv(N, 2), LANE) * LANE)
        nblk = pl.cdiv(N, Nb)
        Npad = nblk * Nb

        # One fused pass (under jit): cast + transpose to lane-dense layout
        # X[t*C + c, b*W + w] = state[b, t, w, c], append the constant-1 row,
        # pad the lane axis to a multiple of Nb.
        x = jnp.transpose(state.astype(mxu_dtype), (1, 3, 0, 2)).reshape(HC, N)
        x = jnp.concatenate([x, jnp.ones((1, N), mxu_dtype)], axis=0)
        if Npad != N:
            x = jnp.pad(x, ((0, 0), (0, Npad - N)))

        out_flat = pl.pallas_call(
            kernel,
            out_shape=jax.ShapeDtypeStruct((1, Npad), jnp.float32),
            grid=(nblk,),
            in_specs=[
                pl.BlockSpec((HCa, Nb), lambda g: (0, g)),     # X slab
                pl.BlockSpec((R1a, HCa), lambda g: (0, 0)),    # conv1 Toeplitz
                pl.BlockSpec((R2a, R1a), lambda g: (0, 0)),    # conv2
                pl.BlockSpec((1, R2a), lambda g: (0, 0)),      # conv3
            ],
            out_specs=pl.BlockSpec((1, Nb), lambda g: (0, g)),
            compiler_params=pltpu.CompilerParams(
                dimension_semantics=("parallel",)),
        )(x, w1big, w2big, w3big)

        return out_flat[0, :N].reshape(B, W)                   # (B, W)

    return apply


def cnn_feature_extractor_pallas(state, params, *, mxu_dtype=jnp.float32):
    """One-shot convenience wrapper (prefer make_cnn_feature_extractor)."""
    B, H, W, C = state.shape
    return make_cnn_feature_extractor(params, (H, W, C), mxu_dtype=mxu_dtype)(state)


# ---------------- pure-JAX reference (for verification) ----------------------
def cnn_feature_extractor_ref(state, params):
    w1, b1, w2, b2, w3, b3 = params
    s = jnp.transpose(state, (0, 3, 1, 2))
    last_weights = s[:, -1:, -1:, :]
    prices = s[:, :-1, :, :]
    dn = ('NCHW', 'OIHW', 'NCHW')
    y = lax.conv_general_dilated(prices, w1, (1, 1), 'VALID', dimension_numbers=dn)
    y = jnp.maximum(y + b1[None, :, None, None], 0.0)
    y = lax.conv_general_dilated(y, w2, (1, 1), 'VALID', dimension_numbers=dn)
    y = jnp.maximum(y + b2[None, :, None, None], 0.0)
    y = jnp.concatenate([y, last_weights], axis=1)
    z = lax.conv_general_dilated(y, w3, (1, 1), 'VALID', dimension_numbers=dn)
    z = jnp.maximum(z + b3[None, :, None, None], 0.0)
    return z[:, 0, 0, :]


if __name__ == "__main__":
    key = jax.random.PRNGKey(0)
    # states_dim = (window H, assets W, features C)
    H, W, C = 16, 8, 4
    B = 2
    KH, h1, h2 = 3, 2, 20
    H1 = H - KH + 1

    ks = jax.random.split(key, 8)
    x = jax.random.normal(ks[0], (B, H, W, C), dtype=jnp.float32)
    params = (
        0.1 * jax.random.normal(ks[1], (h1, C - 1, KH, 1), dtype=jnp.float32),
        0.1 * jax.random.normal(ks[2], (h1,), dtype=jnp.float32),
        0.1 * jax.random.normal(ks[3], (h2, h1, H1, 1), dtype=jnp.float32),
        0.1 * jax.random.normal(ks[4], (h2,), dtype=jnp.float32),
        0.1 * jax.random.normal(ks[5], (1, h2 + 1, 1, 1), dtype=jnp.float32),
        0.1 * jax.random.normal(ks[6], (1,), dtype=jnp.float32),
    )

    fwd_f32 = make_cnn_feature_extractor(params, (H, W, C), mxu_dtype=jnp.float32)
    fwd_bf16 = make_cnn_feature_extractor(params, (H, W, C), mxu_dtype=jnp.bfloat16)

    # f32 path: exact match against the conv reference.
    out = jax.block_until_ready(fwd_f32(x))
    ref = jax.block_until_ready(cnn_feature_extractor_ref(x, params))
    assert out.shape == (B, W), out.shape
    assert jnp.allclose(out, ref, atol=1e-4, rtol=1e-4), (out, ref)

    # bf16 MXU-operand path (v6e/v7x bandwidth/MXU win): relaxed tolerance.
    out_bf = jax.block_until_ready(fwd_bf16(x))
    assert jnp.allclose(out_bf, ref, atol=2e-2, rtol=2e-2), (out_bf, ref)

    # Multi-block grid + padded last block (N = 320 -> Nb = 256, 2 blocks).
    B2 = 40
    x2 = jax.random.normal(ks[7], (B2, H, W, C), dtype=jnp.float32)
    out2 = jax.block_until_ready(fwd_f32(x2))
    ref2 = jax.block_until_ready(cnn_feature_extractor_ref(x2, params))
    assert out2.shape == (B2, W), out2.shape
    assert jnp.allclose(out2, ref2, atol=1e-4, rtol=1e-4), (out2, ref2)

    print("KERNEL_OK")
</pallas_src>

<mosaic_0001>
module attributes {stable_mosaic.version = 11 : i64} {
  func.func @kernel(%arg0: i32, %arg1: memref<65x128xf32, #tpu.memory_space<vmem>>, %arg2: memref<29x65xf32, #tpu.memory_space<vmem>>, %arg3: memref<21x29xf32, #tpu.memory_space<vmem>>, %arg4: memref<1x21xf32, #tpu.memory_space<vmem>>, %arg5: memref<1x128xf32, #tpu.memory_space<vmem>>) attributes {dimension_semantics = [#tpu.dimension_semantics<parallel>], iteration_bounds = array<i64: 1>, scalar_prefetch = 0 : i64, scratch_operands = 0 : i64, tpu.core_type = #tpu.core_type<tc>, window_params = [{transform_indices = @transform_0, window_bounds = array<i64: 65, 128>}, {pipeline_mode = #tpu.pipeline_mode<synchronous>, transform_indices = @transform_1, window_bounds = array<i64: 29, 65>}, {pipeline_mode = #tpu.pipeline_mode<synchronous>, transform_indices = @transform_2, window_bounds = array<i64: 21, 29>}, {pipeline_mode = #tpu.pipeline_mode<synchronous>, transform_indices = @transform_3, window_bounds = array<i64: 1, 21>}, {transform_indices = @transform_4, window_bounds = array<i64: 1, 128>}]} {
    %c0 = arith.constant 0 : index
    %c0_0 = arith.constant 0 : index
    %0 = vector.load %arg1[%c0, %c0_0] : memref<65x128xf32, #tpu.memory_space<vmem>>, vector<65x128xf32>
    %c0_1 = arith.constant 0 : index
    %c0_2 = arith.constant 0 : index
    %1 = vector.load %arg2[%c0_1, %c0_2] : memref<29x65xf32, #tpu.memory_space<vmem>>, vector<29x65xf32>
    %cst = arith.constant dense<0.000000e+00> : vector<29x128xf32>
    %2 = tpu.matmul %1, %0, %cst {dimension_numbers = #tpu.dot_dimension_numbers<[1], [0], [0], [1], [0, 0, 1, 1], [], []>} : vector<29x65xf32>, vector<65x128xf32>, vector<29x128xf32> -> vector<29x128xf32>
    %cst_3 = arith.constant 0.000000e+00 : f32
    %3 = vector.broadcast %cst_3 : f32 to vector<29x128xf32>
    %4 = arith.maximumf %2, %3 : vector<29x128xf32>
    %c0_4 = arith.constant 0 : index
    %c0_5 = arith.constant 0 : index
    %5 = vector.load %arg3[%c0_4, %c0_5] : memref<21x29xf32, #tpu.memory_space<vmem>>, vector<21x29xf32>
    %cst_6 = arith.constant dense<0.000000e+00> : vector<21x128xf32>
    %6 = tpu.matmul %5, %4, %cst_6 {dimension_numbers = #tpu.dot_dimension_numbers<[1], [0], [0], [1], [0, 0, 1, 1], [], []>} : vector<21x29xf32>, vector<29x128xf32>, vector<21x128xf32> -> vector<21x128xf32>
    %cst_7 = arith.constant 0.000000e+00 : f32
    %7 = vector.broadcast %cst_7 : f32 to vector<21x128xf32>
    %8 = arith.maximumf %6, %7 : vector<21x128xf32>
    %c0_8 = arith.constant 0 : index
    %c0_9 = arith.constant 0 : index
    %9 = vector.load %arg4[%c0_8, %c0_9] : memref<1x21xf32, #tpu.memory_space<vmem>>, vector<1x21xf32>
    %cst_10 = arith.constant dense<0.000000e+00> : vector<1x128xf32>
    %10 = tpu.matmul %9, %8, %cst_10 {dimension_numbers = #tpu.dot_dimension_numbers<[1], [0], [0], [1], [0, 0, 1, 1], [], []>} : vector<1x21xf32>, vector<21x128xf32>, vector<1x128xf32> -> vector<1x128xf32>
    %11 = vector.extract_strided_slice %0 {offsets = [63, 0], sizes = [1, 128], strides = [1, 1]} : vector<65x128xf32> to vector<1x128xf32>
    %cst_11 = arith.constant -0.0302213728 : f32
    %12 = vector.broadcast %cst_11 : f32 to vector<1x128xf32>
    %13 = arith.mulf %12, %11 : vector<1x128xf32>
    %14 = arith.addf %10, %13 : vector<1x128xf32>
    %cst_12 = arith.constant 0.000000e+00 : f32
    %15 = vector.broadcast %cst_12 : f32 to vector<1x128xf32>
    %16 = arith.maximumf %14, %15 : vector<1x128xf32>
    %c0_13 = arith.constant 0 : index
    %c0_14 = arith.constant 0 : index
    %17 = vector.load %arg5[%c0_13, %c0_14] : memref<1x128xf32, #tpu.memory_space<vmem>>, vector<1x128xf32>
    tpu.vector_store %arg5[%c0_13, %c0_14], %16 {strides = array<i32>} : memref<1x128xf32, #tpu.memory_space<vmem>>, vector<1x128xf32>,
    return
  }
  func.func @transform_0(%arg0: i32) -> (i32, i32) {
    %c0_i32 = arith.constant 0 : i32
    %c0_i32_0 = arith.constant 0 : i32
    return %c0_i32, %arg0 : i32, i32
  }
  func.func @transform_1(%arg0: i32) -> (i32, i32) {
    %c0_i32 = arith.constant 0 : i32
    %c0_i32_0 = arith.constant 0 : i32
    %c0_i32_1 = arith.constant 0 : i32
    return %c0_i32, %c0_i32_0 : i32, i32
  }
  func.func @transform_2(%arg0: i32) -> (i32, i32) {
    %c0_i32 = arith.constant 0 : i32
    %c0_i32_0 = arith.constant 0 : i32
    %c0_i32_1 = arith.constant 0 : i32
    return %c0_i32, %c0_i32_0 : i32, i32
  }
  func.func @transform_3(%arg0: i32) -> (i32, i32) {
    %c0_i32 = arith.constant 0 : i32
    %c0_i32_0 = arith.constant 0 : i32
    %c0_i32_1 = arith.constant 0 : i32
    return %c0_i32, %c0_i32_0 : i32, i32
  }
  func.func @transform_4(%arg0: i32) -> (i32, i32) {
    %c0_i32 = arith.constant 0 : i32
    %c0_i32_0 = arith.constant 0 : i32
    return %c0_i32, %arg0 : i32, i32
  }
}

</mosaic_0001>

<llo_original>
// kernel: squeeze.1
$region0: #{squeeze.1}
  %s0 = inlined_call_operand.vmem [shape: f32[16], index: 0, kind: input, shape index: {}]
  %s1 = inlined_call_operand.hbm [shape: f32[2,8], index: 1, kind: output, shape index: {}]
  $region1: #{squeeze.1} parent=0
    #allocation0 [shape = 'u8[1024]{0}', space=vmem, size = 0x400, scoped, tag = 'operand span for operand 1']
    #allocation1 [shape = 's32[1]{0}', space=sflag, size = 0x4, scoped, tag = 'scoped memory for squeeze.1']
    #allocation2 [shape = 'u8[4096]{0}', space=vmem, size = 0x1000, scoped, tag = 'scoped mem for output reshape']
    #allocation3 [shape = 'u8[4096]{0}', space=vmem, size = 0x1000, scoped, tag = 'scoped mem for input reshape']
    %2 = vsyncpa [#allocation1], 0
    %s4 = sshllo.u32 0, 1
    %v5 = vld [vmem:[%s0] sm:%s4]
    %6 = vst [vmem:[#allocation3] sm:%s4] %v5
    %v7 = vld [vmem:[#allocation3] sm:$0x1]
    %vm8 = vcmask 64512
    %9 = vst.msk [vmem:[#allocation2] sm:$0x1] %vm8, %v7
    %v10 = vld [vmem:[#allocation3] sm:$0x1]
    %11 = vrot.lane.b32.xlu0 %v10, 120
    %v12 = vpop.permute.xlu0 %11
    %vm13 = vcmask 64512
    %s14 = scalar_lea.vmem [#allocation2], 1
    %15 = vst.msk [vmem:[%s14] sm:$0x1] %vm13, %v12
    %s17 = sshllo.u32 0, 2
    %v19 = vld [vmem:[#allocation2] sm:%s17]
    %s20 = sshllo.u32 0, 2
    %21 = vst [vmem:[#allocation0] sm:%s20] %v19
    %s23 = ssub.s32 32, 32
    %24 = vsyncadd [#allocation1], %s23
    %s26 = sshll.u32 [#allocation0], 4
    %s27 = int_to_ptr.vmem [resolvable:$true] %s26
    %29 = dma.vmem_to_hbm [thread:$0]  %s27, 32, %s1, [#allocation1]
    %30 = dma.done [#allocation1], 32
    %31 = vsyncpa [#allocation1], 1

// kernel: apply.1
$region0: #{apply.1}
  #allocation0 [shape = 'u32[]', space=smem, size = 0x4, offset = 0x4, fixed_abs, tag = 'smem constant byte address 0x4 - core index']
  #allocation1 [shape = 'u32[144,128]{1,0:T(1,128)}', space=vmem, size = 0x12000, scoped, tag = 'internal scratch']
  %s0 = inlined_call_operand.vmem [shape: f32[65,128], index: 0, kind: input, shape index: {}]
  %s1 = inlined_call_operand.vmem [shape: f32[29,65], index: 1, kind: input, shape index: {}]
  %s2 = inlined_call_operand.vmem [shape: f32[21,29], index: 2, kind: input, shape index: {}]
  %s3 = inlined_call_operand.vmem [shape: f32[1,21], index: 3, kind: input, shape index: {}]
  %s4 = inlined_call_operand.vmem [shape: f32[1,128], index: 4, kind: output, shape index: {}]
  %s5 = sld [smem:[#allocation0]]
  $region26: #{apply.1} parent=0
    _
  %s7 = ssub.s32 1, %s5
  %s8 = scalar_select 0, %s7, %s5
  // Predicated region
  $region2: #{apply.1} parent=0 // pred_check
    _
  $region3: #{apply.1} parent=0 // pred_check_branch
    %10 = sbr.rel (0) target = $region5
  $region4: #{apply.1} parent=0 // pred_region
    _
  $region5: #{apply.1} parent=0 // pred_fallthru
    _
  // Predicated region
  $region6: #{apply.1} parent=0 // pred_check
    _
  $region7: #{apply.1} parent=0 // pred_check_branch
    %12 = sbr.rel (0) target = $region9
  $region8: #{apply.1} parent=0 // pred_region
    _
  $region9: #{apply.1} parent=0 // pred_fallthru
    _
  // Predicated region
  $region10: #{apply.1} parent=0 // pred_check
    _
  $region11: #{apply.1} parent=0 // pred_check_branch
    %14 = sbr.rel (0) target = $region13
  $region12: #{apply.1} parent=0 // pred_region
    _
  $region13: #{apply.1} parent=0 // pred_fallthru
    _
  // Predicated region
  $region14: #{apply.1} parent=0 // pred_check
    _
  $region15: #{apply.1} parent=0 // pred_check_branch
    %16 = sbr.rel (0) target = $region17
  $region16: #{apply.1} parent=0 // pred_region
    _
  $region17: #{apply.1} parent=0 // pred_fallthru
    _
  %v17 = vld [vmem:[%s0] sm:$0xff]
  %v18 = vld [vmem:[%s0 + $0x8] sm:$0xff]
  %v19 = vld [vmem:[%s0 + $0x10] sm:$0xff]
  %v20 = vld [vmem:[%s0 + $0x18] sm:$0xff]
  %v21 = vld [vmem:[%s0 + $0x20] sm:$0xff]
  %v22 = vld [vmem:[%s0 + $0x28] sm:$0xff]
  %v23 = vld [vmem:[%s0 + $0x30] sm:$0xff]
  %v24 = vld [vmem:[%s0 + $0x38] sm:$0xff]
  %v25 = vld [vmem:[%s0 + $0x40] sm:$0x1]
  %v26 = vld [vmem:[%s1] sm:$0xff]
  %v27 = vld [vmem:[%s1 + $0x8] sm:$0xff]
  %v28 = vld [vmem:[%s1 + $0x10] sm:$0xff]
  %v29 = vld [vmem:[%s1 + $0x18] sm:$0x1f]
  %vm30 = vcmask 531456
  %v32 = vsel %vm30, %v26, 0
  %v35 = vsel %vm30, %v27, 0
  %v38 = vsel %vm30, %v28, 0
  %v41 = vsel %vm30, %v29, 0
  %vm43 = vcmask 1040384
  %v45 = vsel %vm43, %v25, 0
  %47 = vmatprep.subr.mxu0 0.0
  %48 = vmatpush1.msra.mxu0 %v17
  %49 = vmatprep.subr.mxu0 0.0
  %50 = vmatpush1.msra.mxu0 %v18
  %51 = vmatprep.subr.mxu0 0.0
  %52 = vmatpush1.msra.mxu0 %v19
  %53 = vmatprep.subr.mxu0 0.0
  %54 = vmatpush1.msra.mxu0 %v20
  %55 = vmatprep.subr.mxu0 0.0
  %56 = vmatpush1.msra.mxu0 %v21
  %57 = vmatprep.subr.mxu0 0.0
  %58 = vmatpush1.msra.mxu0 %v22
  %59 = vmatprep.subr.mxu0 0.0
  %60 = vmatpush1.msra.mxu0 %v23
  %61 = vmatprep.subr.mxu0 0.0
  %62 = vmatpush1.msra.mxu0 %v24
  %63 = vmatprep.subr.mxu0 0.0
  %64 = vmatpush1.msra.mxu0 %v45
  %65 = vmatprep.subr.mxu0 0.0
  %66 = vmatpush1.msra.mxu0 0.0
  %67 = vmatprep.subr.mxu0 0.0
  %68 = vmatpush1.msra.mxu0 0.0
  %69 = vmatprep.subr.mxu0 0.0
  %70 = vmatpush1.msra.mxu0 0.0
  %71 = vmatprep.subr.mxu0 0.0
  %72 = vmatpush1.msra.mxu0 0.0
  %73 = vmatprep.subr.mxu0 0.0
  %74 = vmatpush1.msra.mxu0 0.0
  %75 = vmatprep.subr.mxu0 0.0
  %76 = vmatpush1.msra.mxu0 0.0
  %77 = vmatprep.subr.mxu0 0.0
  %78 = vmatpush1.msra.mxu0 0.0
  %79 = vmatprep.subr.mxu0 0.0
  %80 = vmatpush1.msra.mxu0 0.0
  %81 = vmatprep.subr.mxu0 0.0
  %82 = vmatpush1.msra.mxu0 0.0
  %83 = vmatprep.subr.mxu0 0.0
  %84 = vmatpush1.msra.mxu0 0.0
  %85 = vmatprep.subr.mxu0 0.0
  %86 = vmatpush1.msra.mxu0 0.0
  %87 = vmatprep.subr.mxu0 0.0
  %88 = vmatpush1.msra.mxu0 0.0
  %89 = vmatprep.subr.mxu0 0.0
  %90 = vmatpush1.msra.mxu0 0.0
  %91 = vmatprep.subr.mxu0 0.0
  %92 = vmatpush1.msra.mxu0 0.0
  %93 = vmatprep.subr.mxu0 0.0
  %94 = vmatpush1.msra.mxu0 0.0
  %95 = vmatprep.subr.mxu0 0.0
  %96 = vmatpush1.msra.mxu0 0.0
  %97 = vmatprep.subr.mxu0 0.0
  %98 = vmatpush1.msra.mxu0 0.0
  %99 = vmatprep.subr.mxu0 0.0
  %100 = vmatpush1.msra.mxu0 0.0
  %101 = vmatprep.subr.mxu0 0.0
  %102 = vmatpush1.msra.mxu0 0.0
  %103 = vmatprep.subr.mxu0 0.0
  %104 = vmatpush1.msra.mxu0 0.0
  %105 = vmatprep.subr.mxu0 0.0
  %106 = vmatpush1.msra.mxu0 0.0
  %107 = vmatprep.subr.mxu0 0.0
  %108 = vmatpush1.msra.mxu0 0.0
  %109 = vmatprep.subr.mxu0 0.0
  %110 = vmatpush1.msra.mxu0 0.0
  %111 = vmatprep.mubr.f32.mxu0 0.0
  %112 = vmatmul.mubr.f32.gmra.mrb[0].mxu0 %v32
  %v113 = vpop.f32.mrb[0].mxu0
  %v114 = vadd.f32 0.0, %v113
  %v115 = vpop.f32.mrb[0].mxu0
  %116 = vmatprep.mubr.f32.mxu0 0.0
  %117 = vmatmul.mubr.f32.gmra.mrb[0].mxu0 %v35
  %v118 = vpop.f32.mrb[0].mxu0
  %v119 = vadd.f32 0.0, %v118
  %v120 = vpop.f32.mrb[0].mxu0
  %121 = vmatprep.mubr.f32.mxu0 0.0
  %122 = vmatmul.mubr.f32.gmra.mrb[0].mxu0 %v38
  %v123 = vpop.f32.mrb[0].mxu0
  %v124 = vadd.f32 0.0, %v123
  %v125 = vpop.f32.mrb[0].mxu0
  %126 = vmatprep.mubr.f32.mxu0 0.0
  %127 = vmatmul.mubr.f32.gmra.mrb[0].mxu0 %v41
  %v128 = vpop.f32.mrb[0].mxu0
  %v129 = vadd.f32 0.0, %v128
  %v130 = vpop.f32.mrb[0].mxu0
  %131 = vdwg.mxu0
  %v132 = vmax.f32 %v114, 0.0
  %v133 = vmax.f32 %v119, 0.0
  %v134 = vmax.f32 %v124, 0.0
  %v135 = vmax.f32 %v129, 0.0
  %v136 = vld [vmem:[%s2] sm:$0xff]
  %v137 = vld [vmem:[%s2 + $0x8] sm:$0xff]
  %v138 = vld [vmem:[%s2 + $0x10] sm:$0x1f]
  %vm139 = vcmask 236544
  %v141 = vsel %vm139, %v136, 0
  %v144 = vsel %vm139, %v137, 0
  %v147 = vsel %vm139, %v138, 0
  %vm149 = vcmask 1044480
  %v151 = vsel %vm149, %v135, 0
  %153 = vmatprep.subr.mxu0 0.0
  %154 = vmatpush1.msra.mxu0 %v132
  %155 = vmatprep.subr.mxu0 0.0
  %156 = vmatpush1.msra.mxu0 %v133
  %157 = vmatprep.subr.mxu0 0.0
  %158 = vmatpush1.msra.mxu0 %v134
  %159 = vmatprep.subr.mxu0 0.0
  %160 = vmatpush1.msra.mxu0 %v151
  %161 = vmatprep.subr.mxu0 0.0
  %162 = vmatpush1.msra.mxu0 0.0
  %163 = vmatprep.subr.mxu0 0.0
  %164 = vmatpush1.msra.mxu0 0.0
  %165 = vmatprep.subr.mxu0 0.0
  %166 = vmatpush1.msra.mxu0 0.0
  %167 = vmatprep.subr.mxu0 0.0
  %168 = vmatpush1.msra.mxu0 0.0
  %169 = vmatprep.subr.mxu0 0.0
  %170 = vmatpush1.msra.mxu0 0.0
  %171 = vmatprep.subr.mxu0 0.0
  %172 = vmatpush1.msra.mxu0 0.0
  %173 = vmatprep.subr.mxu0 0.0
  %174 = vmatpush1.msra.mxu0 0.0
  %175 = vmatprep.subr.mxu0 0.0
  %176 = vmatpush1.msra.mxu0 0.0
  %177 = vmatprep.subr.mxu0 0.0
  %178 = vmatpush1.msra.mxu0 0.0
  %179 = vmatprep.subr.mxu0 0.0
  %180 = vmatpush1.msra.mxu0 0.0
  %181 = vmatprep.subr.mxu0 0.0
  %182 = vmatpush1.msra.mxu0 0.0
  %183 = vmatprep.subr.mxu0 0.0
  %184 = vmatpush1.msra.mxu0 0.0
  %185 = vmatprep.subr.mxu0 0.0
  %186 = vmatpush1.msra.mxu0 0.0
  %187 = vmatprep.subr.mxu0 0.0
  %188 = vmatpush1.msra.mxu0 0.0
  %189 = vmatprep.subr.mxu0 0.0
  %190 = vmatpush1.msra.mxu0 0.0
  %191 = vmatprep.subr.mxu0 0.0
  %192 = vmatpush1.msra.mxu0 0.0
  %193 = vmatprep.subr.mxu0 0.0
  %194 = vmatpush1.msra.mxu0 0.0
  %195 = vmatprep.subr.mxu0 0.0
  %196 = vmatpush1.msra.mxu0 0.0
  %197 = vmatprep.subr.mxu0 0.0
  %198 = vmatpush1.msra.mxu0 0.0
  %199 = vmatprep.subr.mxu0 0.0
  %200 = vmatpush1.msra.mxu0 0.0
  %201 = vmatprep.subr.mxu0 0.0
  %202 = vmatpush1.msra.mxu0 0.0
  %203 = vmatprep.subr.mxu0 0.0
  %204 = vmatpush1.msra.mxu0 0.0
  %205 = vmatprep.subr.mxu0 0.0
  %206 = vmatpush1.msra.mxu0 0.0
  %207 = vmatprep.subr.mxu0 0.0
  %208 = vmatpush1.msra.mxu0 0.0
  %209 = vmatprep.subr.mxu0 0.0
  %210 = vmatpush1.msra.mxu0 0.0
  %211 = vmatprep.subr.mxu0 0.0
  %212 = vmatpush1.msra.mxu0 0.0
  %213 = vmatprep.subr.mxu0 0.0
  %214 = vmatpush1.msra.mxu0 0.0
  %215 = vmatprep.subr.mxu0 0.0
  %216 = vmatpush1.msra.mxu0 0.0
  %217 = vmatprep.mubr.f32.mxu0 0.0
  %218 = vmatmul.mubr.f32.gmra.mrb[0].mxu0 %v141
  %v219 = vpop.f32.mrb[0].mxu0
  %v220 = vadd.f32 0.0, %v219
  %v221 = vpop.f32.mrb[0].mxu0
  %222 = vmatprep.mubr.f32.mxu0 0.0
  %223 = vmatmul.mubr.f32.gmra.mrb[0].mxu0 %v144
  %v224 = vpop.f32.mrb[0].mxu0
  %v225 = vadd.f32 0.0, %v224
  %v226 = vpop.f32.mrb[0].mxu0
  %227 = vmatprep.mubr.f32.mxu0 0.0
  %228 = vmatmul.mubr.f32.gmra.mrb[0].mxu0 %v147
  %v229 = vpop.f32.mrb[0].mxu0
  %v230 = vadd.f32 0.0, %v229
  %v231 = vpop.f32.mrb[0].mxu0
  %232 = vdwg.mxu0
  %v233 = vmax.f32 %v220, 0.0
  %v234 = vmax.f32 %v225, 0.0
  %v235 = vmax.f32 %v230, 0.0
  %v236 = vld [vmem:[%s3] sm:$0x1]
  %v237 = vmul.f32 %v24, -0.030221373
  %v239 = vrot.slane %v237, 7
  %vm241 = vcmask 171008
  %v243 = vsel %vm241, %v236, 0
  %v246 = vsel %vm149, %v235, 0
  %248 = vmatprep.subr.mxu0 0.0
  %249 = vmatpush1.msra.mxu0 %v233
  %250 = vmatprep.subr.mxu0 0.0
  %251 = vmatpush1.msra.mxu0 %v234
  %252 = vmatprep.subr.mxu0 0.0
  %253 = vmatpush1.msra.mxu0 %v246
  %254 = vmatprep.subr.mxu0 0.0
  %255 = vmatpush1.msra.mxu0 0.0
  %256 = vmatprep.subr.mxu0 0.0
  %257 = vmatpush1.msra.mxu0 0.0
  %258 = vmatprep.subr.mxu0 0.0
  %259 = vmatpush1.msra.mxu0 0.0
  %260 = vmatprep.subr.mxu0 0.0
  %261 = vmatpush1.msra.mxu0 0.0
  %262 = vmatprep.subr.mxu0 0.0
  %263 = vmatpush1.msra.mxu0 0.0
  %264 = vmatprep.subr.mxu0 0.0
  %265 = vmatpush1.msra.mxu0 0.0
  %266 = vmatprep.subr.mxu0 0.0
  %267 = vmatpush1.msra.mxu0 0.0
  %268 = vmatprep.subr.mxu0 0.0
  %269 = vmatpush1.msra.mxu0 0.0
  %270 = vmatprep.subr.mxu0 0.0
  %271 = vmatpush1.msra.mxu0 0.0
  %272 = vmatprep.subr.mxu0 0.0
  %273 = vmatpush1.msra.mxu0 0.0
  %274 = vmatprep.subr.mxu0 0.0
  %275 = vmatpush1.msra.mxu0 0.0
  %276 = vmatprep.subr.mxu0 0.0
  %277 = vmatpush1.msra.mxu0 0.0
  %278 = vmatprep.subr.mxu0 0.0
  %279 = vmatpush1.msra.mxu0 0.0
  %280 = vmatprep.subr.mxu0 0.0
  %281 = vmatpush1.msra.mxu0 0.0
  %282 = vmatprep.subr.mxu0 0.0
  %283 = vmatpush1.msra.mxu0 0.0
  %284 = vmatprep.subr.mxu0 0.0
  %285 = vmatpush1.msra.mxu0 0.0
  %286 = vmatprep.subr.mxu0 0.0
  %287 = vmatpush1.msra.mxu0 0.0
  %288 = vmatprep.subr.mxu0 0.0
  %289 = vmatpush1.msra.mxu0 0.0
  %290 = vmatprep.subr.mxu0 0.0
  %291 = vmatpush1.msra.mxu0 0.0
  %292 = vmatprep.subr.mxu0 0.0
  %293 = vmatpush1.msra.mxu0 0.0
  %294 = vmatprep.subr.mxu0 0.0
  %295 = vmatpush1.msra.mxu0 0.0
  %296 = vmatprep.subr.mxu0 0.0
  %297 = vmatpush1.msra.mxu0 0.0
  %298 = vmatprep.subr.mxu0 0.0
  %299 = vmatpush1.msra.mxu0 0.0
  %300 = vmatprep.subr.mxu0 0.0
  %301 = vmatpush1.msra.mxu0 0.0
  %302 = vmatprep.subr.mxu0 0.0
  %303 = vmatpush1.msra.mxu0 0.0
  %304 = vmatprep.subr.mxu0 0.0
  %305 = vmatpush1.msra.mxu0 0.0
  %306 = vmatprep.subr.mxu0 0.0
  %307 = vmatpush1.msra.mxu0 0.0
  %308 = vmatprep.subr.mxu0 0.0
  %309 = vmatpush1.msra.mxu0 0.0
  %310 = vmatprep.subr.mxu0 0.0
  %311 = vmatpush1.msra.mxu0 0.0
  %312 = vmatprep.mubr.f32.mxu0 0.0
  %313 = vmatmul.mubr.f32.gmra.mrb[0].mxu0 %v243
  %v314 = vpop.f32.mrb[0].mxu0
  %v315 = vadd.f32 %v239, %v314
  %v316 = vpop.f32.mrb[0].mxu0
  %317 = vdwg.mxu0
  %v318 = vmax.f32 %v315, 0.0
  %319 = vst [vmem:[%s4] sm:$0x1] %v318
  // Predicated region
  $region18: #{apply.1} parent=0 // pred_check
    _
  $region19: #{apply.1} parent=0 // pred_check_branch
    %321 = sbr.rel (0) target = $region21
  $region20: #{apply.1} parent=0 // pred_region
    _
  $region21: #{apply.1} parent=0 // pred_fallthru
    _
  // Predicated region
  $region22: #{apply.1} parent=0 // pred_check
    _
  $region23: #{apply.1} parent=0 // pred_check_branch
    %323 = sbr.rel (0) target = $region25
  $region24: #{apply.1} parent=0 // pred_region
    _
  $region25: #{apply.1} parent=0 // pred_fallthru
    _

</llo_original>
